<compile_context>
chip_gen: v6e
topology: v6e:2x2x1
jax: 0.10.0
libtpu: 0.0.40
codegen_flags: <defaults>
</compile_context>

<pallas_src>
import functools

import jax
import jax.numpy as jnp
from jax.experimental import pallas as pl
from jax.experimental.pallas import tpu as pltpu


def _round_up(x, m):
    return (x + m - 1) // m * m


def _xw_kernel(x_ref, w_ref, h_ref):
    # h = x @ W for one row-tile (f32 accumulate on the MXU).
    h = jnp.dot(x_ref[...], w_ref[...], preferred_element_type=jnp.float32)
    h_ref[...] = h.astype(h_ref.dtype)


def _adj_h_kernel(adj_ref, h_ref, out_ref, acc_ref, *, concat):
    k = pl.program_id(1)

    @pl.when(k == 0)
    def _():
        acc_ref[...] = jnp.zeros_like(acc_ref)

    acc_ref[...] += jnp.dot(adj_ref[...], h_ref[...],
                            preferred_element_type=jnp.float32)

    @pl.when(k == pl.num_programs(1) - 1)
    def _():
        hp = acc_ref[...]
        if concat:
            # ELU; exp is clamped so large positives cannot overflow before the select.
            hp = jnp.where(hp > 0, hp, jnp.exp(jnp.minimum(hp, 0.0)) - 1.0)
        out_ref[...] = hp.astype(out_ref.dtype)


def gat_forward(x, W, a, adj, *, alpha=0.2, dropout=0.0, concat=True,
                compute_dtype=jnp.bfloat16, block=512):
    """Forward pass of GraphAttentionLayer.

    NOTE: exactly as in the PyTorch source, `attention @ h` is overwritten by
    `adj @ h`, so `a`, `alpha` and `dropout` do not influence the output.  They
    are accepted only for interface parity and the dead attention/softmax path
    is not computed.
    """
    # TODO(synk): F.dropout on the attention matrix is omitted -- its result is dead
    # code in the reference forward (overwritten by adj @ h).
    del a, alpha, dropout

    N, f_in = x.shape
    f_out = W.shape[1]

    # Lane-dense feature dim: pad F_out up to a multiple of 128.
    f_pad = _round_up(f_out, 128)
    # adj row/column tile: >=128 wide (lane rule) and a divisor of the padded N.
    # 512-wide tiles reach ~85% of the HBM roofline and fit comfortably in VMEM on
    # v5e/v6e/v7x (adj tile 512x512 bf16 = 0.5 MiB, double-buffered ~1 MiB).
    blk = min(block, _round_up(N, 128))
    n_pad = _round_up(N, blk)

    x_p = jnp.pad(x.astype(jnp.float32), ((0, n_pad - N), (0, 0)))
    w_p = jnp.pad(W.astype(jnp.float32), ((0, 0), (0, f_pad - f_out)))
    # adj is a 0/1 mask, so the bf16 cast is exact and halves the dominant HBM stream.
    # TODO(synk): on v5e/v6e an int8 adj would cut that stream 4x (no int MXU on v7x).
    adj_p = jnp.pad(adj.astype(compute_dtype), ((0, n_pad - N), (0, n_pad - N)))

    # ---- Stage 1: h = x @ W  (output in compute_dtype for the stage-2 stream) ----
    h_p = pl.pallas_call(
        _xw_kernel,
        out_shape=jax.ShapeDtypeStruct((n_pad, f_pad), compute_dtype),
        grid=(n_pad // blk,),
        in_specs=[
            pl.BlockSpec((blk, f_in), lambda i: (i, 0)),
            pl.BlockSpec((f_in, f_pad), lambda i: (0, 0)),
        ],
        out_specs=pl.BlockSpec((blk, f_pad), lambda i: (i, 0)),
        compiler_params=pltpu.CompilerParams(dimension_semantics=("parallel",)),
    )(x_p, w_p)

    # ---- Stage 2: out = ELU(adj @ h), adj streamed tile-by-tile ----
    out_p = pl.pallas_call(
        functools.partial(_adj_h_kernel, concat=bool(concat)),
        out_shape=jax.ShapeDtypeStruct((n_pad, f_pad), jnp.float32),
        grid=(n_pad // blk, n_pad // blk),
        in_specs=[
            pl.BlockSpec((blk, blk), lambda i, k: (i, k)),     # adj tile
            pl.BlockSpec((blk, f_pad), lambda i, k: (k, 0)),   # h K-slice
        ],
        out_specs=pl.BlockSpec((blk, f_pad), lambda i, k: (i, 0)),
        scratch_shapes=[pltpu.VMEM((blk, f_pad), jnp.float32)],
        compiler_params=pltpu.CompilerParams(
            dimension_semantics=("parallel", "arbitrary")),
    )(adj_p, h_p)

    return out_p[:N, :f_out]


def _xavier_uniform(key, shape, gain):
    fan_in, fan_out = shape[0], shape[1]
    bound = gain * (6.0 / (fan_in + fan_out)) ** 0.5
    return jax.random.uniform(key, shape, jnp.float32, -bound, bound)


def _reference(x, W, a, adj, alpha=0.2, concat=True):
    # Pure-JAX mirror of the PyTorch forward, including its dead attention path.
    h = x @ W
    f_out = W.shape[1]
    e = jax.nn.leaky_relu(h @ a[:f_out] + (h @ a[f_out:]).T, negative_slope=alpha)
    att = jnp.where(adj > 0, e, -9e15)
    att = jax.nn.softmax(att, axis=1)
    _ = att @ h                     # dead: overwritten in the reference module
    h_prime = adj @ h               # actual output path
    return jax.nn.elu(h_prime) if concat else h_prime


if __name__ == "__main__":
    N, f_in, f_out = 16, 32, 32
    alpha = 0.2

    key = jax.random.PRNGKey(0)
    k_w, k_a, k_x, k_adj = jax.random.split(key, 4)

    W = _xavier_uniform(k_w, (f_in, f_out), gain=1.414)
    a = _xavier_uniform(k_a, (2 * f_out, 1), gain=1.414)
    x = jax.random.normal(k_x, (N, f_in), jnp.float32)
    adj = (jax.random.uniform(k_adj, (N, N)) > 0.5).astype(jnp.float32)
    adj = jnp.maximum(adj, jnp.eye(N, dtype=jnp.float32))  # self-loops

    ref = _reference(x, W, a, adj, alpha=alpha, concat=True)

    # f32 streams: tight check against the pure-JAX reference.
    out_f32 = gat_forward(x, W, a, adj, alpha=alpha, concat=True,
                          compute_dtype=jnp.float32)
    out_f32 = jax.block_until_ready(out_f32)
    assert out_f32.shape == (N, f_out) and out_f32.dtype == jnp.float32
    assert jnp.allclose(out_f32, ref, atol=1e-5, rtol=1e-5), "f32 mismatch vs reference"

    # bf16 streams (default, bandwidth-optimized): adj cast is exact (0/1 mask),
    # h is rounded to bf16, so use a looser tolerance.
    out_bf16 = gat_forward(x, W, a, adj, alpha=alpha, concat=True)
    out_bf16 = jax.block_until_ready(out_bf16)
    assert out_bf16.shape == (N, f_out) and out_bf16.dtype == jnp.float32
    assert jnp.allclose(out_bf16, ref, atol=5e-2, rtol=5e-2), "bf16 mismatch vs reference"

    print("KERNEL_OK")
</pallas_src>

<mosaic_0001>
module attributes {stable_mosaic.version = 11 : i64} {
  func.func @_xw_kernel(%arg0: i32, %arg1: memref<128x32xf32, #tpu.memory_space<vmem>>, %arg2: memref<32x128xf32, #tpu.memory_space<vmem>>, %arg3: memref<128x128xf32, #tpu.memory_space<vmem>>) attributes {dimension_semantics = [#tpu.dimension_semantics<parallel>], iteration_bounds = array<i64: 1>, scalar_prefetch = 0 : i64, scratch_operands = 0 : i64, tpu.core_type = #tpu.core_type<tc>, window_params = [{transform_indices = @transform_0, window_bounds = array<i64: 128, 32>}, {pipeline_mode = #tpu.pipeline_mode<synchronous>, transform_indices = @transform_1, window_bounds = array<i64: 32, 128>}, {transform_indices = @transform_2, window_bounds = array<i64: 128, 128>}]} {
    %c0 = arith.constant 0 : index
    %c0_0 = arith.constant 0 : index
    %0 = vector.load %arg1[%c0, %c0_0] : memref<128x32xf32, #tpu.memory_space<vmem>>, vector<128x32xf32>
    %c0_1 = arith.constant 0 : index
    %c0_2 = arith.constant 0 : index
    %1 = vector.load %arg2[%c0_1, %c0_2] : memref<32x128xf32, #tpu.memory_space<vmem>>, vector<32x128xf32>
    %cst = arith.constant dense<0.000000e+00> : vector<128x128xf32>
    %2 = tpu.matmul %0, %1, %cst {dimension_numbers = #tpu.dot_dimension_numbers<[1], [0], [0], [1], [0, 0, 1, 1], [], []>} : vector<128x32xf32>, vector<32x128xf32>, vector<128x128xf32> -> vector<128x128xf32>
    %c0_3 = arith.constant 0 : index
    %c0_4 = arith.constant 0 : index
    %3 = vector.load %arg3[%c0_3, %c0_4] : memref<128x128xf32, #tpu.memory_space<vmem>>, vector<128x128xf32>
    tpu.vector_store %arg3[%c0_3, %c0_4], %2 {strides = array<i32>} : memref<128x128xf32, #tpu.memory_space<vmem>>, vector<128x128xf32>,
    return
  }
  func.func @transform_0(%arg0: i32) -> (i32, i32) {
    %c0_i32 = arith.constant 0 : i32
    %c0_i32_0 = arith.constant 0 : i32
    return %arg0, %c0_i32 : i32, i32
  }
  func.func @transform_1(%arg0: i32) -> (i32, i32) {
    %c0_i32 = arith.constant 0 : i32
    %c0_i32_0 = arith.constant 0 : i32
    %c0_i32_1 = arith.constant 0 : i32
    return %c0_i32, %c0_i32_0 : i32, i32
  }
  func.func @transform_2(%arg0: i32) -> (i32, i32) {
    %c0_i32 = arith.constant 0 : i32
    %c0_i32_0 = arith.constant 0 : i32
    return %arg0, %c0_i32 : i32, i32
  }
}

</mosaic_0001>

<llo_original>
// kernel: tpu_custom_call.1
$region0: #{tpu_custom_call.1}
  #allocation0 [shape = 'u32[]', space=smem, size = 0x4, offset = 0x4, fixed_abs, tag = 'smem constant byte address 0x4 - core index']
  #allocation1 [shape = 'u32[144,128]{1,0:T(1,128)}', space=vmem, size = 0x12000, scoped, tag = 'internal scratch']
  %s0 = inlined_call_operand.vmem [shape: f32[128,32], index: 0, kind: input, shape index: {}]
  %s1 = inlined_call_operand.vmem [shape: f32[32,128], index: 1, kind: input, shape index: {}]
  %s2 = inlined_call_operand.hbm [shape: f32[128,128], index: 2, kind: output, shape index: {}]
  %s3 = sld [smem:[#allocation0]]
  $region18: #{tpu_custom_call.1} parent=0
    _
  %s5 = ssub.s32 1, %s3
  %s6 = scalar_select 0, %s5, %s3
  $region1: #{tpu_custom_call.1} parent=0
    #allocation2 [shape = 'u8[65536]{0}', space=vmem, size = 0x10000, scoped, tag = 'output window, operand 0, single buffered']
    #allocation3 [shape = 's32[1]{0}', space=sflag, size = 0x4, scoped, tag = 'scoped memory for tpu_custom_call.1']
    %7 = vsyncpa [#allocation3], 0
    // Predicated region
    $region2: #{tpu_custom_call.1} parent=1 // pred_check
      _
    $region3: #{tpu_custom_call.1} parent=1 // pred_check_branch
      %9 = sbr.rel (0) target = $region5
    $region4: #{tpu_custom_call.1} parent=1 // pred_region
      _
    $region5: #{tpu_custom_call.1} parent=1 // pred_fallthru
      _
    // Predicated region
    $region6: #{tpu_custom_call.1} parent=1 // pred_check
      _
    $region7: #{tpu_custom_call.1} parent=1 // pred_check_branch
      %11 = sbr.rel (0) target = $region9
    $region8: #{tpu_custom_call.1} parent=1 // pred_region
      _
    $region9: #{tpu_custom_call.1} parent=1 // pred_fallthru
      _
    %v12 = vld [vmem:[%s0] sm:$0xff]
    %v13 = vld [vmem:[%s0 + $0x8] sm:$0xff]
    %v14 = vld [vmem:[%s0 + $0x10] sm:$0xff]
    %v15 = vld [vmem:[%s0 + $0x18] sm:$0xff]
    %v16 = vld [vmem:[%s0 + $0x20] sm:$0xff]
    %v17 = vld [vmem:[%s0 + $0x28] sm:$0xff]
    %v18 = vld [vmem:[%s0 + $0x30] sm:$0xff]
    %v19 = vld [vmem:[%s0 + $0x38] sm:$0xff]
    %v20 = vld [vmem:[%s0 + $0x40] sm:$0xff]
    %v21 = vld [vmem:[%s0 + $0x48] sm:$0xff]
    %v22 = vld [vmem:[%s0 + $0x50] sm:$0xff]
    %v23 = vld [vmem:[%s0 + $0x58] sm:$0xff]
    %v24 = vld [vmem:[%s0 + $0x60] sm:$0xff]
    %v25 = vld [vmem:[%s0 + $0x68] sm:$0xff]
    %v26 = vld [vmem:[%s0 + $0x70] sm:$0xff]
    %v27 = vld [vmem:[%s0 + $0x78] sm:$0xff]
    %v28 = vld [vmem:[%s1] sm:$0xff]
    %v29 = vld [vmem:[%s1 + $0x8] sm:$0xff]
    %v30 = vld [vmem:[%s1 + $0x10] sm:$0xff]
    %v31 = vld [vmem:[%s1 + $0x18] sm:$0xff]
    %vm32 = vcmask 261120
    %v34 = vsel %vm32, %v12, 0
    %v37 = vsel %vm32, %v13, 0
    %v40 = vsel %vm32, %v14, 0
    %v43 = vsel %vm32, %v15, 0
    %v46 = vsel %vm32, %v16, 0
    %v49 = vsel %vm32, %v17, 0
    %v52 = vsel %vm32, %v18, 0
    %v55 = vsel %vm32, %v19, 0
    %v58 = vsel %vm32, %v20, 0
    %v61 = vsel %vm32, %v21, 0
    %v64 = vsel %vm32, %v22, 0
    %v67 = vsel %vm32, %v23, 0
    %v70 = vsel %vm32, %v24, 0
    %v73 = vsel %vm32, %v25, 0
    %v76 = vsel %vm32, %v26, 0
    %v79 = vsel %vm32, %v27, 0
    %81 = vmatprep.subr.mxu0 0.0
    %82 = vmatpush1.msra.mxu0 0.0
    %83 = vmatprep.subr.mxu0 0.0
    %84 = vmatpush1.msra.mxu0 0.0
    %85 = vmatprep.subr.mxu0 0.0
    %86 = vmatpush1.msra.mxu0 0.0
    %87 = vmatprep.subr.mxu0 0.0
    %88 = vmatpush1.msra.mxu0 0.0
    %89 = vmatprep.subr.mxu0 0.0
    %90 = vmatpush1.msra.mxu0 0.0
    %91 = vmatprep.subr.mxu0 0.0
    %92 = vmatpush1.msra.mxu0 0.0
    %93 = vmatprep.subr.mxu0 0.0
    %94 = vmatpush1.msra.mxu0 0.0
    %95 = vmatprep.subr.mxu0 0.0
    %96 = vmatpush1.msra.mxu0 0.0
    %97 = vmatprep.subr.mxu0 0.0
    %98 = vmatpush1.msra.mxu0 0.0
    %99 = vmatprep.subr.mxu0 0.0
    %100 = vmatpush1.msra.mxu0 0.0
    %101 = vmatprep.subr.mxu0 0.0
    %102 = vmatpush1.msra.mxu0 0.0
    %103 = vmatprep.subr.mxu0 0.0
    %104 = vmatpush1.msra.mxu0 0.0
    %105 = vmatprep.subr.mxu0 0.0
    %106 = vmatpush1.msra.mxu0 %v31
    %107 = vmatprep.subr.mxu0 0.0
    %108 = vmatpush1.msra.mxu0 %v30
    %109 = vmatprep.subr.mxu0 0.0
    %110 = vmatpush1.msra.mxu0 %v29
    %111 = vmatprep.subr.mxu0 0.0
    %112 = vmatpush1.msra.mxu0 %v28
    %113 = vmatprep.subr.mxu0 0.0
    %114 = vmatpush2.msra.mxu0 0.0
    %115 = vmatprep.subr.mxu0 0.0
    %116 = vmatpush2.msra.mxu0 0.0
    %117 = vmatprep.subr.mxu0 0.0
    %118 = vmatpush2.msra.mxu0 0.0
    %119 = vmatprep.subr.mxu0 0.0
    %120 = vmatpush2.msra.mxu0 0.0
    %121 = vmatprep.subr.mxu0 0.0
    %122 = vmatpush2.msra.mxu0 0.0
    %123 = vmatprep.subr.mxu0 0.0
    %124 = vmatpush2.msra.mxu0 0.0
    %125 = vmatprep.subr.mxu0 0.0
    %126 = vmatpush2.msra.mxu0 0.0
    %127 = vmatprep.subr.mxu0 0.0
    %128 = vmatpush2.msra.mxu0 0.0
    %129 = vmatprep.subr.mxu0 0.0
    %130 = vmatpush2.msra.mxu0 0.0
    %131 = vmatprep.subr.mxu0 0.0
    %132 = vmatpush2.msra.mxu0 0.0
    %133 = vmatprep.subr.mxu0 0.0
    %134 = vmatpush2.msra.mxu0 0.0
    %135 = vmatprep.subr.mxu0 0.0
    %136 = vmatpush2.msra.mxu0 0.0
    %137 = vmatprep.subr.mxu0 0.0
    %138 = vmatpush2.msra.mxu0 0.0
    %139 = vmatprep.subr.mxu0 0.0
    %140 = vmatpush2.msra.mxu0 0.0
    %141 = vmatprep.subr.mxu0 0.0
    %142 = vmatpush2.msra.mxu0 0.0
    %143 = vmatprep.subr.mxu0 0.0
    %144 = vmatpush2.msra.mxu0 0.0
    %145 = vmatprep.mubr.f32.mxu0 0.0
    %146 = vmatmul.mubr.f32.gmra.mxu0 %v34
    %v147 = vpop.f32.mrf.mxu0
    %v148 = vadd.f32 0.0, %v147
    %v149 = vpop.f32.mrf.mxu0
    %150 = vmatprep.mubr.f32.mxu0 0.0
    %151 = vmatmul.mubr.f32.gmra.mxu0 %v37
    %v152 = vpop.f32.mrf.mxu0
    %v153 = vadd.f32 0.0, %v152
    %v154 = vpop.f32.mrf.mxu0
    %155 = vmatprep.mubr.f32.mxu0 0.0
    %156 = vmatmul.mubr.f32.gmra.mxu0 %v40
    %v157 = vpop.f32.mrf.mxu0
    %v158 = vadd.f32 0.0, %v157
    %v159 = vpop.f32.mrf.mxu0
    %160 = vmatprep.mubr.f32.mxu0 0.0
    %161 = vmatmul.mubr.f32.gmra.mxu0 %v43
    %v162 = vpop.f32.mrf.mxu0
    %v163 = vadd.f32 0.0, %v162
    %v164 = vpop.f32.mrf.mxu0
    %165 = vmatprep.mubr.f32.mxu0 0.0
    %166 = vmatmul.mubr.f32.gmra.mxu0 %v46
    %v167 = vpop.f32.mrf.mxu0
    %v168 = vadd.f32 0.0, %v167
    %v169 = vpop.f32.mrf.mxu0
    %170 = vmatprep.mubr.f32.mxu0 0.0
    %171 = vmatmul.mubr.f32.gmra.mxu0 %v49
    %v172 = vpop.f32.mrf.mxu0
    %v173 = vadd.f32 0.0, %v172
    %v174 = vpop.f32.mrf.mxu0
    %175 = vmatprep.mubr.f32.mxu0 0.0
    %176 = vmatmul.mubr.f32.gmra.mxu0 %v52
    %v177 = vpop.f32.mrf.mxu0
    %v178 = vadd.f32 0.0, %v177
    %v179 = vpop.f32.mrf.mxu0
    %180 = vmatprep.mubr.f32.mxu0 0.0
    %181 = vmatmul.mubr.f32.gmra.mxu0 %v55
    %v182 = vpop.f32.mrf.mxu0
    %v183 = vadd.f32 0.0, %v182
    %v184 = vpop.f32.mrf.mxu0
    %185 = vmatprep.mubr.f32.mxu0 0.0
    %186 = vmatmul.mubr.f32.gmra.mxu0 %v58
    %v187 = vpop.f32.mrf.mxu0
    %v188 = vadd.f32 0.0, %v187
    %v189 = vpop.f32.mrf.mxu0
    %190 = vmatprep.mubr.f32.mxu0 0.0
    %191 = vmatmul.mubr.f32.gmra.mxu0 %v61
    %v192 = vpop.f32.mrf.mxu0
    %v193 = vadd.f32 0.0, %v192
    %v194 = vpop.f32.mrf.mxu0
    %195 = vmatprep.mubr.f32.mxu0 0.0
    %196 = vmatmul.mubr.f32.gmra.mxu0 %v64
    %v197 = vpop.f32.mrf.mxu0
    %v198 = vadd.f32 0.0, %v197
    %v199 = vpop.f32.mrf.mxu0
    %200 = vmatprep.mubr.f32.mxu0 0.0
    %201 = vmatmul.mubr.f32.gmra.mxu0 %v67
    %v202 = vpop.f32.mrf.mxu0
    %v203 = vadd.f32 0.0, %v202
    %v204 = vpop.f32.mrf.mxu0
    %205 = vmatprep.mubr.f32.mxu0 0.0
    %206 = vmatmul.mubr.f32.gmra.mxu0 %v70
    %v207 = vpop.f32.mrf.mxu0
    %v208 = vadd.f32 0.0, %v207
    %v209 = vpop.f32.mrf.mxu0
    %210 = vmatprep.mubr.f32.mxu0 0.0
    %211 = vmatmul.mubr.f32.gmra.mxu0 %v73
    %v212 = vpop.f32.mrf.mxu0
    %v213 = vadd.f32 0.0, %v212
    %v214 = vpop.f32.mrf.mxu0
    %215 = vmatprep.mubr.f32.mxu0 0.0
    %216 = vmatmul.mubr.f32.gmra.mxu0 %v76
    %v217 = vpop.f32.mrf.mxu0
    %v218 = vadd.f32 0.0, %v217
    %v219 = vpop.f32.mrf.mxu0
    %220 = vmatprep.mubr.f32.mxu0 0.0
    %221 = vmatmul.mubr.f32.gmra.mxu0 %v79
    %v222 = vpop.f32.mrf.mxu0
    %v223 = vadd.f32 0.0, %v222
    %v224 = vpop.f32.mrf.mxu0
    %225 = vdwg.mxu0
    %226 = vst [vmem:[#allocation2] sm:$0xff] %v148
    %227 = vst [vmem:[#allocation2 + $0x8] sm:$0xff] %v153
    %228 = vst [vmem:[#allocation2 + $0x10] sm:$0xff] %v158
    %229 = vst [vmem:[#allocation2 + $0x18] sm:$0xff] %v163
    %230 = vst [vmem:[#allocation2 + $0x20] sm:$0xff] %v168
    %231 = vst [vmem:[#allocation2 + $0x28] sm:$0xff] %v173
    %232 = vst [vmem:[#allocation2 + $0x30] sm:$0xff] %v178
    %233 = vst [vmem:[#allocation2 + $0x38] sm:$0xff] %v183
    %234 = vst [vmem:[#allocation2 + $0x40] sm:$0xff] %v188
    %235 = vst [vmem:[#allocation2 + $0x48] sm:$0xff] %v193
    %236 = vst [vmem:[#allocation2 + $0x50] sm:$0xff] %v198
    %237 = vst [vmem:[#allocation2 + $0x58] sm:$0xff] %v203
    %238 = vst [vmem:[#allocation2 + $0x60] sm:$0xff] %v208
    %239 = vst [vmem:[#allocation2 + $0x68] sm:$0xff] %v213
    %240 = vst [vmem:[#allocation2 + $0x70] sm:$0xff] %v218
    %241 = vst [vmem:[#allocation2 + $0x78] sm:$0xff] %v223
    // Predicated region
    $region10: #{tpu_custom_call.1} parent=1 // pred_check
      _
    $region11: #{tpu_custom_call.1} parent=1 // pred_check_branch
      %243 = sbr.rel (0) target = $region13
    $region12: #{tpu_custom_call.1} parent=1 // pred_region
      %s245 = ssub.s32 2048, 2048
      %246 = vsyncadd [#allocation3], %s245
      %s247 = sshll.u32 [#allocation2], 4
      %s248 = int_to_ptr.vmem [resolvable:$true] %s247
      %253 = dma.vmem_to_hbm [thread:$0]  %s248, 2048, %s2, [#allocation3], 128, 128, 8
    $region13: #{tpu_custom_call.1} parent=1 // pred_fallthru
      _
    // Predicated region
    $region14: #{tpu_custom_call.1} parent=1 // pred_check
      _
    $region15: #{tpu_custom_call.1} parent=1 // pred_check_branch
      %255 = sbr.rel (0) target = $region17
    $region16: #{tpu_custom_call.1} parent=1 // pred_region
      %256 = dma.done [#allocation3], 2048
    $region17: #{tpu_custom_call.1} parent=1 // pred_fallthru
      _
    %257 = vsyncpa [#allocation3], 1

</llo_original>
